<compile_context>
chip_gen: v7x
topology: tpu7x:2x2x1
jax: 0.10.0
libtpu: 0.0.40
codegen_flags: <defaults>
</compile_context>

<pallas_src>
import functools

import jax
import jax.numpy as jnp
from jax import lax
from jax.experimental import pallas as pl
from jax.experimental.pallas import tpu as pltpu


def _fused_conv_linear_kernel(w_ref, b_ref, x_ref, out_ref, xpad_ref, *,
                              C_in, K, L, L_out, stride, padding, strip):
    """One batch-lane tile.

    w_ref   : SMEM (C_in*K,) f32    fused (conv x linear) taps
    b_ref   : SMEM (1,)      f32    fused bias
    x_ref   : VMEM (C_in, L, TN)    bf16 input tile, batch on lanes
    out_ref : VMEM (L_out, TN) f32  output tile, batch on lanes
    xpad_ref: VMEM (L + 2*padding, strip) f32 scratch holding one padded
              channel strip (in-kernel halo; no padded copy in HBM).
    """
    tn = x_ref.shape[-1]
    n_strips = tn // strip
    l_pad = L + 2 * padding

    if padding > 0:
        # Halo rows are written once per grid step; strips/channels only ever
        # overwrite the interior rows, so the halo stays zero.
        zeros = jnp.zeros((padding, strip), dtype=jnp.float32)
        xpad_ref[0:padding, :] = zeros
        xpad_ref[padding + L:l_pad, :] = zeros

    # Static strip loop: each strip loads, accumulates and stores its own
    # lane slice, so only one (L_out, strip) accumulator plus one tap
    # temporary is live at a time -- no vreg spills when TN grows to
    # thousands of lanes.
    for s in range(n_strips):
        j = s * strip                                    # static lane offset
        acc = jnp.zeros((L_out, strip), dtype=jnp.float32)
        for c in range(C_in):
            # bf16 HBM load, upcast immediately; accumulation stays f32.
            xpad_ref[padding:padding + L, :] = (
                x_ref[c, :, j:j + strip].astype(jnp.float32))
            xcp = xpad_ref[...]                          # (l_pad, strip) f32
            for k in range(K):
                if stride == 1:
                    tap = xcp[k:k + L_out, :]
                else:
                    # Strided taps: compute only the needed outputs in-kernel.
                    # TODO(synk): verify strided sublane-slice lowering on all
                    # generations before using a stride > 1 config in prod.
                    tap = lax.slice(
                        xcp, (k, 0),
                        (k + (L_out - 1) * stride + 1, strip),
                        (stride, 1))
                acc = acc + tap * w_ref[c * K + k]
        out_ref[:, j:j + strip] = acc + b_ref[0]


def _pick_batch_tile(N):
    """Lane-axis (batch) tile size TN.

    Small N: one full block (Pallas allows the last block dim == full dim).
    Large N: a multiple of 512 lanes, capped at 8192 so double-buffered
    in+out tiles stay ~3 MiB (well under the 32 MiB scoped VMEM, which is
    also the v7x default), while per-step HBM bytes dwarf the ~0.35 us
    grid-step overhead.  Keeps >=2 grid steps whenever N > 512 so
    dimension_semantics=("parallel",) can shard across v7x's 2 TensorCores.
    """
    if N <= 512:
        return N
    return min(8192, 512 * max(1, N // 1024))


def simple_cnn_forward(x, w_conv, b_conv, w_lin, b_lin, *, stride, padding):
    """x: (N, C_in, L) float32.  Returns (N, L_out) float32."""
    N, C_in, L = x.shape
    C_out, _, K = w_conv.shape
    L_out = (L + 2 * padding - K) // stride + 1
    L_pad = L + 2 * padding

    # ---- fold Linear(out_channels, 1) into the conv weights (wrapper) ------
    w_lin_vec = w_lin.reshape(C_out).astype(jnp.float32)             # (C_out,)
    w_fused = jnp.einsum("ock,o->ck", w_conv.astype(jnp.float32),
                         w_lin_vec)                                   # (C_in, K)
    w_flat = w_fused.reshape(C_in * K)
    b_fused = (jnp.dot(b_conv.astype(jnp.float32), w_lin_vec)
               + b_lin.reshape(()).astype(jnp.float32)).reshape(1)

    # Lane-dense layout: batch on the lane axis, L on sublanes; bf16 halves
    # HBM read bytes (upcast + f32 accumulation happen in-kernel).  No jnp.pad:
    # the halo is built in-kernel, so x is materialized in HBM only once.
    x_t = jnp.transpose(x, (1, 2, 0)).astype(jnp.bfloat16)           # (C_in, L, N)

    TN = _pick_batch_tile(N)
    STRIP = TN if TN <= 512 else 512           # TN is a multiple of 512 if > 512
    grid = (pl.cdiv(N, TN),)

    kernel = functools.partial(
        _fused_conv_linear_kernel, C_in=C_in, K=K, L=L, L_out=L_out,
        stride=stride, padding=padding, strip=STRIP)

    out_t = pl.pallas_call(
        kernel,
        out_shape=jax.ShapeDtypeStruct((L_out, N), jnp.float32),
        grid=grid,
        in_specs=[
            pl.BlockSpec(memory_space=pltpu.MemorySpace.SMEM),        # w_flat
            pl.BlockSpec(memory_space=pltpu.MemorySpace.SMEM),        # b_fused
            pl.BlockSpec((C_in, L, TN), lambda i: (0, 0, i)),         # x tile
        ],
        out_specs=pl.BlockSpec((L_out, TN), lambda i: (0, i)),
        scratch_shapes=[pltpu.VMEM((L_pad, STRIP), jnp.float32)],
        compiler_params=pltpu.CompilerParams(
            dimension_semantics=("parallel",),
            vmem_limit_bytes=32 * 1024 * 1024),
        cost_estimate=pl.CostEstimate(
            flops=2 * N * C_in * K * L_out,
            transcendentals=0,
            bytes_accessed=(2 * N * C_in * L          # bf16 input, read once
                            + 4 * N * L_out           # f32 output
                            + 4 * (C_in * K + 1)),    # fused weights + bias
        ),
    )(w_flat, b_fused, x_t)

    return jnp.transpose(out_t, (1, 0))                # (N, L_out) f32


if __name__ == "__main__":
    # Module hyperparameters (small, consistent with the forward pass).
    N, C_in, L = 2, 4, 16
    C_out, K, stride, padding = 8, 3, 1, 1

    key = jax.random.PRNGKey(0)
    k_x, k_wc, k_wl, k_bl = jax.random.split(key, 4)

    # Input (NCL, like PyTorch Conv1d).
    x = jax.random.normal(k_x, (N, C_in, L), dtype=jnp.float32)

    # Parameter init mirroring the module's __init__:
    #   conv weight ~ U(-sqrt(1/in_channels), +sqrt(1/in_channels)), conv bias 0
    #   linear weight/bias ~ U(-1/sqrt(out_channels), +1/sqrt(out_channels))
    wr = jnp.sqrt(1.0 / C_in)
    w_conv = jax.random.uniform(k_wc, (C_out, C_in, K), minval=-wr, maxval=wr,
                                dtype=jnp.float32)
    b_conv = jnp.zeros((C_out,), dtype=jnp.float32)
    lr = 1.0 / jnp.sqrt(jnp.float32(C_out))
    w_lin = jax.random.uniform(k_wl, (1, C_out), minval=-lr, maxval=lr,
                               dtype=jnp.float32)
    b_lin = jax.random.uniform(k_bl, (1,), minval=-lr, maxval=lr,
                               dtype=jnp.float32)

    out = simple_cnn_forward(x, w_conv, b_conv, w_lin, b_lin,
                             stride=stride, padding=padding)
    jax.block_until_ready(out)

    # Reference in plain JAX on the same bf16-quantized input the kernel reads
    # (so only summation order differs from the fused kernel math).
    x_q = x.astype(jnp.bfloat16).astype(jnp.float32)
    conv_ref = lax.conv_general_dilated(
        x_q, w_conv, window_strides=(stride,), padding=[(padding, padding)],
        dimension_numbers=("NCH", "OIH", "NCH")) + b_conv[None, :, None]
    ref = jnp.einsum("ncl,oc->nlo", conv_ref, w_lin).squeeze(-1) + b_lin

    L_out = (L + 2 * padding - K) // stride + 1
    assert out.shape == (N, L_out)
    assert jnp.allclose(out, ref, atol=2e-4, rtol=1e-4)

    print("KERNEL_OK")
</pallas_src>

<mosaic_0001>
module attributes {stable_mosaic.version = 11 : i64} {
  func.func @_fused_conv_linear_kernel(%arg0: i32, %arg1: memref<12xf32, #tpu.memory_space<smem>>, %arg2: memref<1xf32, #tpu.memory_space<smem>>, %arg3: memref<4x16x2xbf16, #tpu.memory_space<vmem>>, %arg4: memref<16x2xf32, #tpu.memory_space<vmem>>, %arg5: memref<18x2xf32, #tpu.memory_space<vmem>>) attributes {dimension_semantics = [#tpu.dimension_semantics<parallel>], iteration_bounds = array<i64: 1>, scalar_prefetch = 0 : i64, scratch_operands = 1 : i64, tpu.core_type = #tpu.core_type<tc>, window_params = [{transform_indices = @transform_0, window_bounds = array<i64: 12>}, {transform_indices = @transform_1, window_bounds = array<i64: 1>}, {transform_indices = @transform_2, window_bounds = array<i64: 4, 16, 2>}, {transform_indices = @transform_3, window_bounds = array<i64: 16, 2>}]} {
    %cst = arith.constant 0.000000e+00 : f32
    %0 = vector.broadcast %cst : f32 to vector<1x2xf32>
    %c0 = arith.constant 0 : index
    %c0_0 = arith.constant 0 : index
    %1 = vector.load %arg5[%c0, %c0_0] : memref<18x2xf32, #tpu.memory_space<vmem>>, vector<1x2xf32>
    tpu.vector_store %arg5[%c0, %c0_0], %0 {strides = array<i32>} : memref<18x2xf32, #tpu.memory_space<vmem>>, vector<1x2xf32>,
    %c17 = arith.constant 17 : index
    %c0_1 = arith.constant 0 : index
    %2 = vector.load %arg5[%c17, %c0_1] : memref<18x2xf32, #tpu.memory_space<vmem>>, vector<1x2xf32>
    tpu.vector_store %arg5[%c17, %c0_1], %0 {strides = array<i32>} : memref<18x2xf32, #tpu.memory_space<vmem>>, vector<1x2xf32>,
    %cst_2 = arith.constant 0.000000e+00 : f32
    %3 = vector.broadcast %cst_2 : f32 to vector<16x2xf32>
    %c0_3 = arith.constant 0 : index
    %c0_4 = arith.constant 0 : index
    %c0_5 = arith.constant 0 : index
    %4 = vector.load %arg3[%c0_3, %c0_4, %c0_5] : memref<4x16x2xbf16, #tpu.memory_space<vmem>>, vector<1x16x2xbf16>
    %5 = vector.shape_cast %4 : vector<1x16x2xbf16> to vector<16x2xbf16>
    %6 = arith.extf %5 : vector<16x2xbf16> to vector<16x2xf32>
    %c1 = arith.constant 1 : index
    %c0_6 = arith.constant 0 : index
    %7 = vector.load %arg5[%c1, %c0_6] : memref<18x2xf32, #tpu.memory_space<vmem>>, vector<16x2xf32>
    tpu.vector_store %arg5[%c1, %c0_6], %6 {strides = array<i32>} : memref<18x2xf32, #tpu.memory_space<vmem>>, vector<16x2xf32>,
    %c0_7 = arith.constant 0 : index
    %c0_8 = arith.constant 0 : index
    %8 = vector.load %arg5[%c0_7, %c0_8] : memref<18x2xf32, #tpu.memory_space<vmem>>, vector<18x2xf32>
    %9 = vector.extract_strided_slice %8 {offsets = [0, 0], sizes = [16, 2], strides = [1, 1]} : vector<18x2xf32> to vector<16x2xf32>
    %c0_9 = arith.constant 0 : index
    %10 = memref.load %arg1[%c0_9] : memref<12xf32, #tpu.memory_space<smem>>
    %11 = vector.broadcast %10 : f32 to vector<16x2xf32>
    %12 = arith.mulf %9, %11 : vector<16x2xf32>
    %13 = arith.addf %3, %12 : vector<16x2xf32>
    %14 = vector.extract_strided_slice %8 {offsets = [1, 0], sizes = [16, 2], strides = [1, 1]} : vector<18x2xf32> to vector<16x2xf32>
    %c1_10 = arith.constant 1 : index
    %15 = memref.load %arg1[%c1_10] : memref<12xf32, #tpu.memory_space<smem>>
    %16 = vector.broadcast %15 : f32 to vector<16x2xf32>
    %17 = arith.mulf %14, %16 : vector<16x2xf32>
    %18 = arith.addf %13, %17 : vector<16x2xf32>
    %19 = vector.extract_strided_slice %8 {offsets = [2, 0], sizes = [16, 2], strides = [1, 1]} : vector<18x2xf32> to vector<16x2xf32>
    %c2 = arith.constant 2 : index
    %20 = memref.load %arg1[%c2] : memref<12xf32, #tpu.memory_space<smem>>
    %21 = vector.broadcast %20 : f32 to vector<16x2xf32>
    %22 = arith.mulf %19, %21 : vector<16x2xf32>
    %23 = arith.addf %18, %22 : vector<16x2xf32>
    %c1_11 = arith.constant 1 : index
    %c0_12 = arith.constant 0 : index
    %c0_13 = arith.constant 0 : index
    %24 = vector.load %arg3[%c1_11, %c0_12, %c0_13] : memref<4x16x2xbf16, #tpu.memory_space<vmem>>, vector<1x16x2xbf16>
    %25 = vector.shape_cast %24 : vector<1x16x2xbf16> to vector<16x2xbf16>
    %26 = arith.extf %25 : vector<16x2xbf16> to vector<16x2xf32>
    %c1_14 = arith.constant 1 : index
    %c0_15 = arith.constant 0 : index
    %27 = vector.load %arg5[%c1_14, %c0_15] : memref<18x2xf32, #tpu.memory_space<vmem>>, vector<16x2xf32>
    tpu.vector_store %arg5[%c1_14, %c0_15], %26 {strides = array<i32>} : memref<18x2xf32, #tpu.memory_space<vmem>>, vector<16x2xf32>,
    %c0_16 = arith.constant 0 : index
    %c0_17 = arith.constant 0 : index
    %28 = vector.load %arg5[%c0_16, %c0_17] : memref<18x2xf32, #tpu.memory_space<vmem>>, vector<18x2xf32>
    %29 = vector.extract_strided_slice %28 {offsets = [0, 0], sizes = [16, 2], strides = [1, 1]} : vector<18x2xf32> to vector<16x2xf32>
    %c3 = arith.constant 3 : index
    %30 = memref.load %arg1[%c3] : memref<12xf32, #tpu.memory_space<smem>>
    %31 = vector.broadcast %30 : f32 to vector<16x2xf32>
    %32 = arith.mulf %29, %31 : vector<16x2xf32>
    %33 = arith.addf %23, %32 : vector<16x2xf32>
    %34 = vector.extract_strided_slice %28 {offsets = [1, 0], sizes = [16, 2], strides = [1, 1]} : vector<18x2xf32> to vector<16x2xf32>
    %c4 = arith.constant 4 : index
    %35 = memref.load %arg1[%c4] : memref<12xf32, #tpu.memory_space<smem>>
    %36 = vector.broadcast %35 : f32 to vector<16x2xf32>
    %37 = arith.mulf %34, %36 : vector<16x2xf32>
    %38 = arith.addf %33, %37 : vector<16x2xf32>
    %39 = vector.extract_strided_slice %28 {offsets = [2, 0], sizes = [16, 2], strides = [1, 1]} : vector<18x2xf32> to vector<16x2xf32>
    %c5 = arith.constant 5 : index
    %40 = memref.load %arg1[%c5] : memref<12xf32, #tpu.memory_space<smem>>
    %41 = vector.broadcast %40 : f32 to vector<16x2xf32>
    %42 = arith.mulf %39, %41 : vector<16x2xf32>
    %43 = arith.addf %38, %42 : vector<16x2xf32>
    %c2_18 = arith.constant 2 : index
    %c0_19 = arith.constant 0 : index
    %c0_20 = arith.constant 0 : index
    %44 = vector.load %arg3[%c2_18, %c0_19, %c0_20] : memref<4x16x2xbf16, #tpu.memory_space<vmem>>, vector<1x16x2xbf16>
    %45 = vector.shape_cast %44 : vector<1x16x2xbf16> to vector<16x2xbf16>
    %46 = arith.extf %45 : vector<16x2xbf16> to vector<16x2xf32>
    %c1_21 = arith.constant 1 : index
    %c0_22 = arith.constant 0 : index
    %47 = vector.load %arg5[%c1_21, %c0_22] : memref<18x2xf32, #tpu.memory_space<vmem>>, vector<16x2xf32>
    tpu.vector_store %arg5[%c1_21, %c0_22], %46 {strides = array<i32>} : memref<18x2xf32, #tpu.memory_space<vmem>>, vector<16x2xf32>,
    %c0_23 = arith.constant 0 : index
    %c0_24 = arith.constant 0 : index
    %48 = vector.load %arg5[%c0_23, %c0_24] : memref<18x2xf32, #tpu.memory_space<vmem>>, vector<18x2xf32>
    %49 = vector.extract_strided_slice %48 {offsets = [0, 0], sizes = [16, 2], strides = [1, 1]} : vector<18x2xf32> to vector<16x2xf32>
    %c6 = arith.constant 6 : index
    %50 = memref.load %arg1[%c6] : memref<12xf32, #tpu.memory_space<smem>>
    %51 = vector.broadcast %50 : f32 to vector<16x2xf32>
    %52 = arith.mulf %49, %51 : vector<16x2xf32>
    %53 = arith.addf %43, %52 : vector<16x2xf32>
    %54 = vector.extract_strided_slice %48 {offsets = [1, 0], sizes = [16, 2], strides = [1, 1]} : vector<18x2xf32> to vector<16x2xf32>
    %c7 = arith.constant 7 : index
    %55 = memref.load %arg1[%c7] : memref<12xf32, #tpu.memory_space<smem>>
    %56 = vector.broadcast %55 : f32 to vector<16x2xf32>
    %57 = arith.mulf %54, %56 : vector<16x2xf32>
    %58 = arith.addf %53, %57 : vector<16x2xf32>
    %59 = vector.extract_strided_slice %48 {offsets = [2, 0], sizes = [16, 2], strides = [1, 1]} : vector<18x2xf32> to vector<16x2xf32>
    %c8 = arith.constant 8 : index
    %60 = memref.load %arg1[%c8] : memref<12xf32, #tpu.memory_space<smem>>
    %61 = vector.broadcast %60 : f32 to vector<16x2xf32>
    %62 = arith.mulf %59, %61 : vector<16x2xf32>
    %63 = arith.addf %58, %62 : vector<16x2xf32>
    %c3_25 = arith.constant 3 : index
    %c0_26 = arith.constant 0 : index
    %c0_27 = arith.constant 0 : index
    %64 = vector.load %arg3[%c3_25, %c0_26, %c0_27] : memref<4x16x2xbf16, #tpu.memory_space<vmem>>, vector<1x16x2xbf16>
    %65 = vector.shape_cast %64 : vector<1x16x2xbf16> to vector<16x2xbf16>
    %66 = arith.extf %65 : vector<16x2xbf16> to vector<16x2xf32>
    %c1_28 = arith.constant 1 : index
    %c0_29 = arith.constant 0 : index
    %67 = vector.load %arg5[%c1_28, %c0_29] : memref<18x2xf32, #tpu.memory_space<vmem>>, vector<16x2xf32>
    tpu.vector_store %arg5[%c1_28, %c0_29], %66 {strides = array<i32>} : memref<18x2xf32, #tpu.memory_space<vmem>>, vector<16x2xf32>,
    %c0_30 = arith.constant 0 : index
    %c0_31 = arith.constant 0 : index
    %68 = vector.load %arg5[%c0_30, %c0_31] : memref<18x2xf32, #tpu.memory_space<vmem>>, vector<18x2xf32>
    %69 = vector.extract_strided_slice %68 {offsets = [0, 0], sizes = [16, 2], strides = [1, 1]} : vector<18x2xf32> to vector<16x2xf32>
    %c9 = arith.constant 9 : index
    %70 = memref.load %arg1[%c9] : memref<12xf32, #tpu.memory_space<smem>>
    %71 = vector.broadcast %70 : f32 to vector<16x2xf32>
    %72 = arith.mulf %69, %71 : vector<16x2xf32>
    %73 = arith.addf %63, %72 : vector<16x2xf32>
    %74 = vector.extract_strided_slice %68 {offsets = [1, 0], sizes = [16, 2], strides = [1, 1]} : vector<18x2xf32> to vector<16x2xf32>
    %c10 = arith.constant 10 : index
    %75 = memref.load %arg1[%c10] : memref<12xf32, #tpu.memory_space<smem>>
    %76 = vector.broadcast %75 : f32 to vector<16x2xf32>
    %77 = arith.mulf %74, %76 : vector<16x2xf32>
    %78 = arith.addf %73, %77 : vector<16x2xf32>
    %79 = vector.extract_strided_slice %68 {offsets = [2, 0], sizes = [16, 2], strides = [1, 1]} : vector<18x2xf32> to vector<16x2xf32>
    %c11 = arith.constant 11 : index
    %80 = memref.load %arg1[%c11] : memref<12xf32, #tpu.memory_space<smem>>
    %81 = vector.broadcast %80 : f32 to vector<16x2xf32>
    %82 = arith.mulf %79, %81 : vector<16x2xf32>
    %83 = arith.addf %78, %82 : vector<16x2xf32>
    %c0_32 = arith.constant 0 : index
    %84 = memref.load %arg2[%c0_32] : memref<1xf32, #tpu.memory_space<smem>>
    %85 = vector.broadcast %84 : f32 to vector<16x2xf32>
    %86 = arith.addf %83, %85 : vector<16x2xf32>
    %c0_33 = arith.constant 0 : index
    %c0_34 = arith.constant 0 : index
    %87 = vector.load %arg4[%c0_33, %c0_34] : memref<16x2xf32, #tpu.memory_space<vmem>>, vector<16x2xf32>
    tpu.vector_store %arg4[%c0_33, %c0_34], %86 {strides = array<i32>} : memref<16x2xf32, #tpu.memory_space<vmem>>, vector<16x2xf32>,
    return
  }
  func.func @transform_0(%arg0: i32) -> i32 {
    %c0_i32 = arith.constant 0 : i32
    %c0_i32_0 = arith.constant 0 : i32
    return %c0_i32 : i32
  }
  func.func @transform_1(%arg0: i32) -> i32 {
    %c0_i32 = arith.constant 0 : i32
    %c0_i32_0 = arith.constant 0 : i32
    return %c0_i32 : i32
  }
  func.func @transform_2(%arg0: i32) -> (i32, i32, i32) {
    %c0_i32 = arith.constant 0 : i32
    %c0_i32_0 = arith.constant 0 : i32
    %c0_i32_1 = arith.constant 0 : i32
    return %c0_i32, %c0_i32_0, %arg0 : i32, i32, i32
  }
  func.func @transform_3(%arg0: i32) -> (i32, i32) {
    %c0_i32 = arith.constant 0 : i32
    %c0_i32_0 = arith.constant 0 : i32
    return %c0_i32, %arg0 : i32, i32
  }
}

</mosaic_0001>

<llo_original>
// kernel: tpu_custom_call.1
$region0: #{tpu_custom_call.1}
  #allocation0 [shape = 'u32[]', space=smem, size = 0x4, offset = 0x4, fixed_abs, tag = 'smem constant byte address 0x4 - core index']
  #allocation1 [shape = 'u32[144,128]{1,0:T(1,128)}', space=vmem, size = 0x12000, scoped, tag = 'internal scratch']
  #allocation2 [shape = 'f32[18,2]{1,0:T(8,128)}', space=vmem, size = 0x3000, scoped, tag = 'scratch operand']
  #allocation3 [shape = 'f32[1]{0:T(128)S(6)}', space=smem, size = 0x200, scoped, tag = 'scoped memory for tpu_custom_call.1']
  %s0 = inlined_call_operand.vmem [shape: f32[12], index: 0, kind: input, shape index: {}]
  %s1 = inlined_call_operand.<no memory space> [shape: f32[1], index: 1, kind: input, shape index: {}]
  %s2 = inlined_call_operand.vmem [shape: bf16[4,16,2], index: 2, kind: input, shape index: {}]
  %s3 = inlined_call_operand.vmem [shape: f32[16,2], index: 3, kind: output, shape index: {}]
  %s4 = sld [smem:[#allocation0]]
  $region26: #{tpu_custom_call.1} parent=0
    _
  %s6 = ssub.s32 1, %s4
  %s7 = scalar_select 0, %s6, %s4
  %8 = sst [smem:[#allocation3]] %s1
  $region1: #{tpu_custom_call.1} parent=0
    #allocation4 [shape = 'u8[512]{0}', space=smem, size = 0x200, scoped, tag = 'input window, operand 0, single buffered']
    #allocation5 [shape = 's32[1]{0}', space=sflag, size = 0x4, scoped, tag = 'scoped memory for tpu_custom_call.1']
    %9 = vsyncpa [#allocation5], 0
    // Predicated region
    $region2: #{tpu_custom_call.1} parent=1 // pred_check
      _
    $region3: #{tpu_custom_call.1} parent=1 // pred_check_branch
      %11 = sbr.rel (0) target = $region5
    $region4: #{tpu_custom_call.1} parent=1 // pred_region
      %s13 = ssub.s32 16, 16
      %14 = vsyncadd [#allocation5], %s13
      %s16 = sshll.u32 %s0, 4
      %s17 = int_to_ptr.vmem [resolvable:$true] %s16
      %19 = dma.vmem_to_smem %s17, 16, [#allocation4], [#allocation5]
    $region5: #{tpu_custom_call.1} parent=1 // pred_fallthru
      _
    // Predicated region
    $region6: #{tpu_custom_call.1} parent=1 // pred_check
      _
    $region7: #{tpu_custom_call.1} parent=1 // pred_check_branch
      %21 = sbr.rel (0) target = $region9
    $region8: #{tpu_custom_call.1} parent=1 // pred_region
      _
    $region9: #{tpu_custom_call.1} parent=1 // pred_fallthru
      _
    // Predicated region
    $region10: #{tpu_custom_call.1} parent=1 // pred_check
      _
    $region11: #{tpu_custom_call.1} parent=1 // pred_check_branch
      %23 = sbr.rel (0) target = $region13
    $region12: #{tpu_custom_call.1} parent=1 // pred_region
      _
    $region13: #{tpu_custom_call.1} parent=1 // pred_fallthru
      _
    // Predicated region
    $region14: #{tpu_custom_call.1} parent=1 // pred_check
      _
    $region15: #{tpu_custom_call.1} parent=1 // pred_check_branch
      %25 = sbr.rel (0) target = $region17
    $region16: #{tpu_custom_call.1} parent=1 // pred_region
      %26 = dma.done [#allocation5], 16
    $region17: #{tpu_custom_call.1} parent=1 // pred_fallthru
      _
    %27 = sfence
    %vm28 = vcmask 8192
    %29 = vst.msk [vmem:[#allocation2] sm:$0x1] %vm28, 0.0
    %30 = vst.msk [vmem:[#allocation2 + $0x11] sm:$0x1] %vm28, 0.0
    %v31 = vld [vmem:[%s2] sm:$0xf]
    %v32 = vld [vmem:[%s2 + $0x4] sm:$0xf]
    %v33 = vunpack.c.l.bf16 %v31
    %v34 = vunpack.c.l.bf16 %v32
    %vm35 = vcmask 15360
    %36 = vst.msk [vmem:[#allocation2 + $0x1] sm:$0xff] %vm35, %v33
    %37 = vst.msk [vmem:[#allocation2 + $0x9] sm:$0xff] %vm35, %v34
    %v38 = vld [vmem:[#allocation2] sm:$0xff]
    %v39 = vld [vmem:[#allocation2 + $0x8] sm:$0xff]
    %v40 = vld [vmem:[#allocation2 + $0x10] sm:$0x3]
    %s41 = sld [smem:[#allocation4]]
    %v42 = vstv %s41
    %v43 = vmul.f32 %v38, %v42
    %v44 = vmul.f32 %v39, %v42
    %v45 = vadd.f32 %v43, 0.0
    %v46 = vadd.f32 %v44, 0.0
    %s47 = sld [smem:[#allocation4 + $0x1]]
    %v48 = vstv %s47
    %v49 = vmul.f32 %v38, %v48
    %v50 = vmul.f32 %v39, %v48
    %v51 = vmul.f32 %v40, %v48
    %vm55 = vcmask 1046528
    %v56 = vrot.slane %v49, 1
    %v57 = vrot.slane %v50, 1
    %v58 = vsel %vm55, %v56, %v57
    %v59 = vrot.slane %v51, 1
    %v60 = vsel %vm55, %v57, %v59
    %v63 = vadd.f32 %v45, %v58
    %v64 = vadd.f32 %v46, %v60
    %s65 = sld [smem:[#allocation4 + $0x2]]
    %v66 = vstv %s65
    %v67 = vmul.f32 %v38, %v66
    %v68 = vmul.f32 %v39, %v66
    %v69 = vmul.f32 %v40, %v66
    %vm73 = vcmask 1045504
    %v74 = vrot.slane %v67, 2
    %v75 = vrot.slane %v68, 2
    %v76 = vsel %vm73, %v74, %v75
    %v77 = vrot.slane %v69, 2
    %v78 = vsel %vm73, %v75, %v77
    %v81 = vadd.f32 %v63, %v76
    %v82 = vadd.f32 %v64, %v78
    %s83 = scalar_lea.vmem %s2, 8
    %v84 = vld [vmem:[%s83] sm:$0xf]
    %v85 = vld [vmem:[%s83 + $0x4] sm:$0xf]
    %v86 = vunpack.c.l.bf16 %v84
    %v87 = vunpack.c.l.bf16 %v85
    %88 = vst.msk [vmem:[#allocation2 + $0x1] sm:$0xff] %vm35, %v86
    %89 = vst.msk [vmem:[#allocation2 + $0x9] sm:$0xff] %vm35, %v87
    %v90 = vld [vmem:[#allocation2] sm:$0xff]
    %v91 = vld [vmem:[#allocation2 + $0x8] sm:$0xff]
    %v92 = vld [vmem:[#allocation2 + $0x10] sm:$0x3]
    %s93 = sld [smem:[#allocation4 + $0x3]]
    %v94 = vstv %s93
    %v95 = vmul.f32 %v90, %v94
    %v96 = vmul.f32 %v91, %v94
    %v97 = vadd.f32 %v81, %v95
    %v98 = vadd.f32 %v82, %v96
    %s99 = sld [smem:[#allocation4 + $0x4]]
    %v100 = vstv %s99
    %v101 = vmul.f32 %v90, %v100
    %v102 = vmul.f32 %v91, %v100
    %v103 = vmul.f32 %v92, %v100
    %v107 = vrot.slane %v101, 1
    %v108 = vrot.slane %v102, 1
    %v109 = vsel %vm55, %v107, %v108
    %v110 = vrot.slane %v103, 1
    %v111 = vsel %vm55, %v108, %v110
    %v114 = vadd.f32 %v97, %v109
    %v115 = vadd.f32 %v98, %v111
    %s116 = sld [smem:[#allocation4 + $0x5]]
    %v117 = vstv %s116
    %v118 = vmul.f32 %v90, %v117
    %v119 = vmul.f32 %v91, %v117
    %v120 = vmul.f32 %v92, %v117
    %v124 = vrot.slane %v118, 2
    %v125 = vrot.slane %v119, 2
    %v126 = vsel %vm73, %v124, %v125
    %v127 = vrot.slane %v120, 2
    %v128 = vsel %vm73, %v125, %v127
    %v131 = vadd.f32 %v114, %v126
    %v132 = vadd.f32 %v115, %v128
    %s133 = scalar_lea.vmem %s2, 16
    %v134 = vld [vmem:[%s133] sm:$0xf]
    %v135 = vld [vmem:[%s133 + $0x4] sm:$0xf]
    %v136 = vunpack.c.l.bf16 %v134
    %v137 = vunpack.c.l.bf16 %v135
    %138 = vst.msk [vmem:[#allocation2 + $0x1] sm:$0xff] %vm35, %v136
    %139 = vst.msk [vmem:[#allocation2 + $0x9] sm:$0xff] %vm35, %v137
    %v140 = vld [vmem:[#allocation2] sm:$0xff]
    %v141 = vld [vmem:[#allocation2 + $0x8] sm:$0xff]
    %v142 = vld [vmem:[#allocation2 + $0x10] sm:$0x3]
    %s143 = sld [smem:[#allocation4 + $0x6]]
    %v144 = vstv %s143
    %v145 = vmul.f32 %v140, %v144
    %v146 = vmul.f32 %v141, %v144
    %v147 = vadd.f32 %v131, %v145
    %v148 = vadd.f32 %v132, %v146
    %s149 = sld [smem:[#allocation4 + $0x7]]
    %v150 = vstv %s149
    %v151 = vmul.f32 %v140, %v150
    %v152 = vmul.f32 %v141, %v150
    %v153 = vmul.f32 %v142, %v150
    %v157 = vrot.slane %v151, 1
    %v158 = vrot.slane %v152, 1
    %v159 = vsel %vm55, %v157, %v158
    %v160 = vrot.slane %v153, 1
    %v161 = vsel %vm55, %v158, %v160
    %v164 = vadd.f32 %v147, %v159
    %v165 = vadd.f32 %v148, %v161
    %s166 = sld [smem:[#allocation4 + $0x8]]
    %v167 = vstv %s166
    %v168 = vmul.f32 %v140, %v167
    %v169 = vmul.f32 %v141, %v167
    %v170 = vmul.f32 %v142, %v167
    %v174 = vrot.slane %v168, 2
    %v175 = vrot.slane %v169, 2
    %v176 = vsel %vm73, %v174, %v175
    %v177 = vrot.slane %v170, 2
    %v178 = vsel %vm73, %v175, %v177
    %v181 = vadd.f32 %v164, %v176
    %v182 = vadd.f32 %v165, %v178
    %s183 = scalar_lea.vmem %s2, 24
    %v184 = vld [vmem:[%s183] sm:$0xf]
    %v185 = vld [vmem:[%s183 + $0x4] sm:$0xf]
    %v186 = vunpack.c.l.bf16 %v184
    %v187 = vunpack.c.l.bf16 %v185
    %188 = vst.msk [vmem:[#allocation2 + $0x1] sm:$0xff] %vm35, %v186
    %189 = vst.msk [vmem:[#allocation2 + $0x9] sm:$0xff] %vm35, %v187
    %v190 = vld [vmem:[#allocation2] sm:$0xff]
    %v191 = vld [vmem:[#allocation2 + $0x8] sm:$0xff]
    %v192 = vld [vmem:[#allocation2 + $0x10] sm:$0x3]
    %s193 = sld [smem:[#allocation4 + $0x9]]
    %v194 = vstv %s193
    %v195 = vmul.f32 %v190, %v194
    %v196 = vmul.f32 %v191, %v194
    %v197 = vadd.f32 %v181, %v195
    %v198 = vadd.f32 %v182, %v196
    %s199 = sld [smem:[#allocation4 + $0xa]]
    %v200 = vstv %s199
    %v201 = vmul.f32 %v190, %v200
    %v202 = vmul.f32 %v191, %v200
    %v203 = vmul.f32 %v192, %v200
    %v207 = vrot.slane %v201, 1
    %v208 = vrot.slane %v202, 1
    %v209 = vsel %vm55, %v207, %v208
    %v210 = vrot.slane %v203, 1
    %v211 = vsel %vm55, %v208, %v210
    %v214 = vadd.f32 %v197, %v209
    %v215 = vadd.f32 %v198, %v211
    %s216 = sld [smem:[#allocation4 + $0xb]]
    %v217 = vstv %s216
    %v218 = vmul.f32 %v190, %v217
    %v219 = vmul.f32 %v191, %v217
    %v220 = vmul.f32 %v192, %v217
    %v224 = vrot.slane %v218, 2
    %v225 = vrot.slane %v219, 2
    %v226 = vsel %vm73, %v224, %v225
    %v227 = vrot.slane %v220, 2
    %v228 = vsel %vm73, %v225, %v227
    %v231 = vadd.f32 %v214, %v226
    %v232 = vadd.f32 %v215, %v228
    %s233 = sld [smem:[#allocation3]]
    %v234 = vstv %s233
    %v235 = vadd.f32 %v231, %v234
    %v236 = vadd.f32 %v232, %v234
    %237 = vst.msk [vmem:[%s3] sm:$0xff] %vm35, %v235
    %238 = vst.msk [vmem:[%s3 + $0x8] sm:$0xff] %vm35, %v236
    // Predicated region
    $region18: #{tpu_custom_call.1} parent=1 // pred_check
      _
    $region19: #{tpu_custom_call.1} parent=1 // pred_check_branch
      %240 = sbr.rel (0) target = $region21
    $region20: #{tpu_custom_call.1} parent=1 // pred_region
      _
    $region21: #{tpu_custom_call.1} parent=1 // pred_fallthru
      _
    // Predicated region
    $region22: #{tpu_custom_call.1} parent=1 // pred_check
      _
    $region23: #{tpu_custom_call.1} parent=1 // pred_check_branch
      %242 = sbr.rel (0) target = $region25
    $region24: #{tpu_custom_call.1} parent=1 // pred_region
      _
    $region25: #{tpu_custom_call.1} parent=1 // pred_fallthru
      _
    %243 = vsyncpa [#allocation5], 1

</llo_original>
